<compile_context>
chip_gen: v7x
topology: tpu7x:2x2x1
jax: 0.10.0
libtpu: 0.0.40
codegen_flags: <defaults>
</compile_context>

<pallas_src>
import functools

import jax
import jax.numpy as jnp
from jax.experimental import pallas as pl
from jax.experimental.pallas import tpu as pltpu

STATE_SIZE = 42          # bridge=False
ACTION_SIZE = 100
IN_DIM = STATE_SIZE + ACTION_SIZE   # 142
HIDDEN = 500
OUT_DIM = 10
HALF = OUT_DIM // 2      # 5

# Default batch tile: multiple of 256 so full MXU passes are fed on v6e/v7x.
TILE_B_DEFAULT = 1024


def _round_up(n, m):
    return ((n + m - 1) // m) * m


def _irnet_kernel(x_ref, w1_ref, b1_ref, w2_ref, b2_ref, out_ref):
    # x_ref: (TB, 142) f32, w1_ref: (142, 500) bf16, b1_ref: (1, 500) f32
    # w2_ref: (500, 10) bf16, b2_ref: (1, 10) f32, out_ref: (TB, 10) f32
    x = x_ref[...].astype(jnp.bfloat16)

    # Layer 1: Linear + ReLU (bf16 MXU operands, f32 accumulate / epilogue).
    h = jnp.dot(x, w1_ref[...], preferred_element_type=jnp.float32) + b1_ref[...]
    h = jnp.maximum(h, 0.0)

    # Layer 2: Linear.
    params = (jnp.dot(h.astype(jnp.bfloat16), w2_ref[...],
                      preferred_element_type=jnp.float32) + b2_ref[...])

    # Two 5-way softmaxes computed on the combined (TB, 10) tile using a lane
    # mask (avoids materializing two awkward 5-lane-wide slices).
    tb = params.shape[0]
    col = jax.lax.broadcasted_iota(jnp.int32, (tb, OUT_DIM), 1)
    first_half = col < HALF

    neg_inf = jnp.float32(-jnp.inf)
    m1 = jnp.max(jnp.where(first_half, params, neg_inf), axis=-1, keepdims=True)
    m2 = jnp.max(jnp.where(first_half, neg_inf, params), axis=-1, keepdims=True)
    m = jnp.where(first_half, m1, m2)

    e = jnp.exp(params - m)

    s1 = jnp.sum(jnp.where(first_half, e, 0.0), axis=-1, keepdims=True)
    s2 = jnp.sum(jnp.where(first_half, 0.0, e), axis=-1, keepdims=True)
    inv = jnp.where(first_half,
                    pl.reciprocal(s1, approx=True),
                    pl.reciprocal(s2, approx=True))

    out_ref[...] = (e * inv).astype(out_ref.dtype)


@functools.partial(jax.jit, static_argnames=("tile_b",))
def irnetworks_forward(x, w1, b1, w2, b2, *, tile_b=TILE_B_DEFAULT):
    """x: any shape whose total size is a multiple of IN_DIM (like torch reshape).

    Returns (c1, c2): probability tensors of the two OneHotCategorical heads.
    """
    x2 = x.reshape(-1, IN_DIM)
    B = x2.shape[0]

    # Batch tile: multiple of 8 (sublane), capped by tile_b; pad B up to a
    # multiple of the tile so the last grid step never reads/writes garbage.
    tb = min(tile_b, _round_up(max(B, 1), 8))
    bp = _round_up(B, tb)
    if bp != B:
        x2 = jnp.pad(x2, ((0, bp - B), (0, 0)))

    # Pre-cast weights to bf16 once (halves weight DMA bytes, feeds bf16 MXU).
    w1b = w1.astype(jnp.bfloat16)
    w2b = w2.astype(jnp.bfloat16)

    grid = (bp // tb,)

    cost = pl.CostEstimate(
        flops=2 * bp * IN_DIM * HIDDEN + 2 * bp * HIDDEN * OUT_DIM,
        transcendentals=OUT_DIM * bp,
        bytes_accessed=(bp * IN_DIM * 4                      # x (f32)
                        + IN_DIM * HIDDEN * 2                # w1 (bf16)
                        + HIDDEN * OUT_DIM * 2               # w2 (bf16)
                        + (HIDDEN + OUT_DIM) * 4             # biases
                        + bp * OUT_DIM * 4),                 # merged output
    )

    probs = pl.pallas_call(
        _irnet_kernel,
        out_shape=jax.ShapeDtypeStruct((bp, OUT_DIM), jnp.float32),
        grid=grid,
        in_specs=[
            pl.BlockSpec((tb, IN_DIM), lambda i: (i, 0)),         # x: streamed
            pl.BlockSpec((IN_DIM, HIDDEN), lambda i: (0, 0)),     # w1: resident
            pl.BlockSpec((1, HIDDEN), lambda i: (0, 0)),          # b1: resident
            pl.BlockSpec((HIDDEN, OUT_DIM), lambda i: (0, 0)),    # w2: resident
            pl.BlockSpec((1, OUT_DIM), lambda i: (0, 0)),         # b2: resident
        ],
        out_specs=pl.BlockSpec((tb, OUT_DIM), lambda i: (i, 0)),
        compiler_params=pltpu.CompilerParams(
            dimension_semantics=("parallel",),   # v7x: shard batch across 2 TCs
        ),
        cost_estimate=cost,
    )(x2, w1b, b1, w2b, b2)

    probs = probs[:B]
    return probs[:, :HALF], probs[:, HALF:]


def init_params(key):
    """Deterministic init mimicking PyTorch nn.Linear default (U[-1/sqrt(fan_in), +])."""
    k1, k2, k3, k4 = jax.random.split(key, 4)
    bound1 = 1.0 / jnp.sqrt(IN_DIM)
    bound2 = 1.0 / jnp.sqrt(HIDDEN)
    w1 = jax.random.uniform(k1, (IN_DIM, HIDDEN), jnp.float32, -bound1, bound1)
    b1 = jax.random.uniform(k2, (1, HIDDEN), jnp.float32, -bound1, bound1)
    w2 = jax.random.uniform(k3, (HIDDEN, OUT_DIM), jnp.float32, -bound2, bound2)
    b2 = jax.random.uniform(k4, (1, OUT_DIM), jnp.float32, -bound2, bound2)
    return w1, b1, w2, b2


def _ref(x, w1, b1, w2, b2):
    """Pure-JAX f32 reference."""
    x2 = x.reshape(-1, IN_DIM)
    h = jnp.maximum(x2 @ w1 + b1, 0.0)
    p = h @ w2 + b2
    sm = lambda z: jax.nn.softmax(z, axis=-1)
    return sm(p[:, :HALF]), sm(p[:, HALF:])


if __name__ == "__main__":
    key = jax.random.PRNGKey(0)
    kx, kx2, kp = jax.random.split(key, 3)

    w1, b1, w2, b2 = init_params(kp)

    # bf16 MXU operands + approximate EUP reciprocal => compare against the f32
    # reference with a correspondingly relaxed tolerance.
    TOL = 2e-2

    # --- Test 1: tiny batch (B=4), single grid step with row padding. ---
    B = 4
    x = jax.random.normal(kx, (B, IN_DIM), jnp.float32)
    c1, c2 = irnetworks_forward(x, w1, b1, w2, b2)
    jax.block_until_ready((c1, c2))

    assert c1.shape == (B, HALF) and c2.shape == (B, HALF)
    assert jnp.allclose(jnp.sum(c1, axis=-1), 1.0, atol=TOL)
    assert jnp.allclose(jnp.sum(c2, axis=-1), 1.0, atol=TOL)
    r1, r2 = _ref(x, w1, b1, w2, b2)
    assert jnp.allclose(c1, r1, atol=TOL)
    assert jnp.allclose(c2, r2, atol=TOL)

    # --- Test 2: multi-step grid path (B=48, tile_b=16 -> grid=(3,)). ---
    B2 = 48
    x_big = jax.random.normal(kx2, (B2, IN_DIM), jnp.float32)
    d1, d2 = irnetworks_forward(x_big, w1, b1, w2, b2, tile_b=16)
    jax.block_until_ready((d1, d2))

    assert d1.shape == (B2, HALF) and d2.shape == (B2, HALF)
    s1, s2 = _ref(x_big, w1, b1, w2, b2)
    assert jnp.allclose(d1, s1, atol=TOL)
    assert jnp.allclose(d2, s2, atol=TOL)

    print("KERNEL_OK")
</pallas_src>

<mosaic_0001>
module attributes {stable_mosaic.version = 11 : i64} {
  func.func @_irnet_kernel(%arg0: i32, %arg1: memref<8x142xf32, #tpu.memory_space<vmem>>, %arg2: memref<142x500xbf16, #tpu.memory_space<vmem>>, %arg3: memref<1x500xf32, #tpu.memory_space<vmem>>, %arg4: memref<500x10xbf16, #tpu.memory_space<vmem>>, %arg5: memref<1x10xf32, #tpu.memory_space<vmem>>, %arg6: memref<8x10xf32, #tpu.memory_space<vmem>>) attributes {dimension_semantics = [#tpu.dimension_semantics<parallel>], iteration_bounds = array<i64: 1>, scalar_prefetch = 0 : i64, scratch_operands = 0 : i64, tpu.core_type = #tpu.core_type<tc>, window_params = [{transform_indices = @transform_0, window_bounds = array<i64: 8, 142>}, {pipeline_mode = #tpu.pipeline_mode<synchronous>, transform_indices = @transform_1, window_bounds = array<i64: 142, 500>}, {pipeline_mode = #tpu.pipeline_mode<synchronous>, transform_indices = @transform_2, window_bounds = array<i64: 1, 500>}, {pipeline_mode = #tpu.pipeline_mode<synchronous>, transform_indices = @transform_3, window_bounds = array<i64: 500, 10>}, {pipeline_mode = #tpu.pipeline_mode<synchronous>, transform_indices = @transform_4, window_bounds = array<i64: 1, 10>}, {transform_indices = @transform_5, window_bounds = array<i64: 8, 10>}]} {
    %c0 = arith.constant 0 : index
    %c0_0 = arith.constant 0 : index
    %0 = vector.load %arg1[%c0, %c0_0] : memref<8x142xf32, #tpu.memory_space<vmem>>, vector<8x142xf32>
    %1 = arith.truncf %0 : vector<8x142xf32> to vector<8x142xbf16>
    %c0_1 = arith.constant 0 : index
    %c0_2 = arith.constant 0 : index
    %2 = vector.load %arg2[%c0_1, %c0_2] : memref<142x500xbf16, #tpu.memory_space<vmem>>, vector<142x500xbf16>
    %cst = arith.constant dense<0.000000e+00> : vector<8x500xf32>
    %3 = tpu.matmul %1, %2, %cst {dimension_numbers = #tpu.dot_dimension_numbers<[1], [0], [0], [1], [0, 0, 1, 1], [], []>} : vector<8x142xbf16>, vector<142x500xbf16>, vector<8x500xf32> -> vector<8x500xf32>
    %c0_3 = arith.constant 0 : index
    %c0_4 = arith.constant 0 : index
    %4 = vector.load %arg3[%c0_3, %c0_4] : memref<1x500xf32, #tpu.memory_space<vmem>>, vector<1x500xf32>
    %5 = vector.broadcast %4 : vector<1x500xf32> to vector<8x500xf32>
    %6 = arith.addf %3, %5 : vector<8x500xf32>
    %cst_5 = arith.constant 0.000000e+00 : f32
    %7 = vector.broadcast %cst_5 : f32 to vector<8x500xf32>
    %8 = arith.maximumf %6, %7 : vector<8x500xf32>
    %9 = arith.truncf %8 : vector<8x500xf32> to vector<8x500xbf16>
    %c0_6 = arith.constant 0 : index
    %c0_7 = arith.constant 0 : index
    %10 = vector.load %arg4[%c0_6, %c0_7] : memref<500x10xbf16, #tpu.memory_space<vmem>>, vector<500x10xbf16>
    %cst_8 = arith.constant dense<0.000000e+00> : vector<8x10xf32>
    %11 = tpu.matmul %9, %10, %cst_8 {dimension_numbers = #tpu.dot_dimension_numbers<[1], [0], [0], [1], [0, 0, 1, 1], [], []>} : vector<8x500xbf16>, vector<500x10xbf16>, vector<8x10xf32> -> vector<8x10xf32>
    %c0_9 = arith.constant 0 : index
    %c0_10 = arith.constant 0 : index
    %12 = vector.load %arg5[%c0_9, %c0_10] : memref<1x10xf32, #tpu.memory_space<vmem>>, vector<1x10xf32>
    %13 = vector.broadcast %12 : vector<1x10xf32> to vector<8x10xf32>
    %14 = arith.addf %11, %13 : vector<8x10xf32>
    %15 = tpu.iota {dimensions = array<i32: 1>} : vector<8x10xi32>
    %c5_i32 = arith.constant 5 : i32
    %16 = vector.broadcast %c5_i32 : i32 to vector<8x10xi32>
    %17 = arith.cmpi slt, %15, %16 : vector<8x10xi32>
    %cst_11 = arith.constant 0xFF800000 : f32
    %18 = vector.broadcast %cst_11 : f32 to vector<8x10xf32>
    %19 = arith.select %17, %14, %18 : vector<8x10xi1>, vector<8x10xf32>
    %cst_12 = arith.constant dense<0xFF800000> : vector<8xf32>
    %20 = vector.multi_reduction <maximumf>, %19, %cst_12 [1] : vector<8x10xf32> to vector<8xf32>
    %21 = vector.shape_cast %20 : vector<8xf32> to vector<8x1xf32>
    %cst_13 = arith.constant 0xFF800000 : f32
    %22 = vector.broadcast %cst_13 : f32 to vector<8x10xf32>
    %23 = arith.select %17, %22, %14 : vector<8x10xi1>, vector<8x10xf32>
    %cst_14 = arith.constant dense<0xFF800000> : vector<8xf32>
    %24 = vector.multi_reduction <maximumf>, %23, %cst_14 [1] : vector<8x10xf32> to vector<8xf32>
    %25 = vector.shape_cast %24 : vector<8xf32> to vector<8x1xf32>
    %26 = vector.shape_cast %21 : vector<8x1xf32> to vector<8x1xf32>
    %27 = vector.broadcast %26 : vector<8x1xf32> to vector<8x10xf32>
    %28 = vector.shape_cast %25 : vector<8x1xf32> to vector<8x1xf32>
    %29 = vector.broadcast %28 : vector<8x1xf32> to vector<8x10xf32>
    %30 = arith.select %17, %27, %29 : vector<8x10xi1>, vector<8x10xf32>
    %31 = arith.subf %14, %30 : vector<8x10xf32>
    %32 = math.exp %31 : vector<8x10xf32>
    %cst_15 = arith.constant 0.000000e+00 : f32
    %33 = vector.broadcast %cst_15 : f32 to vector<8x10xf32>
    %34 = arith.select %17, %32, %33 : vector<8x10xi1>, vector<8x10xf32>
    %cst_16 = arith.constant dense<0.000000e+00> : vector<8xf32>
    %35 = vector.multi_reduction <add>, %34, %cst_16 [1] : vector<8x10xf32> to vector<8xf32>
    %36 = vector.shape_cast %35 : vector<8xf32> to vector<8x1xf32>
    %cst_17 = arith.constant 0.000000e+00 : f32
    %37 = vector.broadcast %cst_17 : f32 to vector<8x10xf32>
    %38 = arith.select %17, %37, %32 : vector<8x10xi1>, vector<8x10xf32>
    %cst_18 = arith.constant dense<0.000000e+00> : vector<8xf32>
    %39 = vector.multi_reduction <add>, %38, %cst_18 [1] : vector<8x10xf32> to vector<8xf32>
    %40 = vector.shape_cast %39 : vector<8xf32> to vector<8x1xf32>
    %41 = tpu.reciprocal %36 {approx = true} : vector<8x1xf32> -> vector<8x1xf32>
    %42 = tpu.reciprocal %40 {approx = true} : vector<8x1xf32> -> vector<8x1xf32>
    %43 = vector.shape_cast %41 : vector<8x1xf32> to vector<8x1xf32>
    %44 = vector.broadcast %43 : vector<8x1xf32> to vector<8x10xf32>
    %45 = vector.shape_cast %42 : vector<8x1xf32> to vector<8x1xf32>
    %46 = vector.broadcast %45 : vector<8x1xf32> to vector<8x10xf32>
    %47 = arith.select %17, %44, %46 : vector<8x10xi1>, vector<8x10xf32>
    %48 = arith.mulf %32, %47 : vector<8x10xf32>
    %c0_19 = arith.constant 0 : index
    %c0_20 = arith.constant 0 : index
    %49 = vector.load %arg6[%c0_19, %c0_20] : memref<8x10xf32, #tpu.memory_space<vmem>>, vector<8x10xf32>
    tpu.vector_store %arg6[%c0_19, %c0_20], %48 {strides = array<i32>} : memref<8x10xf32, #tpu.memory_space<vmem>>, vector<8x10xf32>,
    return
  }
  func.func @transform_0(%arg0: i32) -> (i32, i32) {
    %c0_i32 = arith.constant 0 : i32
    %c0_i32_0 = arith.constant 0 : i32
    return %arg0, %c0_i32 : i32, i32
  }
  func.func @transform_1(%arg0: i32) -> (i32, i32) {
    %c0_i32 = arith.constant 0 : i32
    %c0_i32_0 = arith.constant 0 : i32
    %c0_i32_1 = arith.constant 0 : i32
    return %c0_i32, %c0_i32_0 : i32, i32
  }
  func.func @transform_2(%arg0: i32) -> (i32, i32) {
    %c0_i32 = arith.constant 0 : i32
    %c0_i32_0 = arith.constant 0 : i32
    %c0_i32_1 = arith.constant 0 : i32
    return %c0_i32, %c0_i32_0 : i32, i32
  }
  func.func @transform_3(%arg0: i32) -> (i32, i32) {
    %c0_i32 = arith.constant 0 : i32
    %c0_i32_0 = arith.constant 0 : i32
    %c0_i32_1 = arith.constant 0 : i32
    return %c0_i32, %c0_i32_0 : i32, i32
  }
  func.func @transform_4(%arg0: i32) -> (i32, i32) {
    %c0_i32 = arith.constant 0 : i32
    %c0_i32_0 = arith.constant 0 : i32
    %c0_i32_1 = arith.constant 0 : i32
    return %c0_i32, %c0_i32_0 : i32, i32
  }
  func.func @transform_5(%arg0: i32) -> (i32, i32) {
    %c0_i32 = arith.constant 0 : i32
    %c0_i32_0 = arith.constant 0 : i32
    return %arg0, %c0_i32 : i32, i32
  }
}

</mosaic_0001>

<llo_original>
// kernel: irnetworks_forward.1
$region0: #{irnetworks_forward.1}
  #allocation0 [shape = 'u32[]', space=smem, size = 0x4, offset = 0x4, fixed_abs, tag = 'smem constant byte address 0x4 - core index']
  #allocation1 [shape = 'u32[144,128]{1,0:T(1,128)}', space=vmem, size = 0x12000, scoped, tag = 'internal scratch']
  %s0 = inlined_call_operand.vmem [shape: f32[8,142], index: 0, kind: input, shape index: {}]
  %s1 = inlined_call_operand.vmem [shape: bf16[142,500], index: 1, kind: input, shape index: {}]
  %s2 = inlined_call_operand.vmem [shape: f32[1,500], index: 2, kind: input, shape index: {}]
  %s3 = inlined_call_operand.vmem [shape: bf16[500,10], index: 3, kind: input, shape index: {}]
  %s4 = inlined_call_operand.vmem [shape: f32[1,10], index: 4, kind: input, shape index: {}]
  %s5 = inlined_call_operand.vmem [shape: f32[8,10], index: 5, kind: output, shape index: {}]
  %s6 = sld [smem:[#allocation0]]
  $region30: #{irnetworks_forward.1} parent=0
    _
  %s8 = ssub.s32 1, %s6
  %s9 = scalar_select 0, %s8, %s6
  // Predicated region
  $region2: #{irnetworks_forward.1} parent=0 // pred_check
    _
  $region3: #{irnetworks_forward.1} parent=0 // pred_check_branch
    %11 = sbr.rel (0) target = $region5
  $region4: #{irnetworks_forward.1} parent=0 // pred_region
    _
  $region5: #{irnetworks_forward.1} parent=0 // pred_fallthru
    _
  // Predicated region
  $region6: #{irnetworks_forward.1} parent=0 // pred_check
    _
  $region7: #{irnetworks_forward.1} parent=0 // pred_check_branch
    %13 = sbr.rel (0) target = $region9
  $region8: #{irnetworks_forward.1} parent=0 // pred_region
    _
  $region9: #{irnetworks_forward.1} parent=0 // pred_fallthru
    _
  // Predicated region
  $region10: #{irnetworks_forward.1} parent=0 // pred_check
    _
  $region11: #{irnetworks_forward.1} parent=0 // pred_check_branch
    %15 = sbr.rel (0) target = $region13
  $region12: #{irnetworks_forward.1} parent=0 // pred_region
    _
  $region13: #{irnetworks_forward.1} parent=0 // pred_fallthru
    _
  // Predicated region
  $region14: #{irnetworks_forward.1} parent=0 // pred_check
    _
  $region15: #{irnetworks_forward.1} parent=0 // pred_check_branch
    %17 = sbr.rel (0) target = $region17
  $region16: #{irnetworks_forward.1} parent=0 // pred_region
    _
  $region17: #{irnetworks_forward.1} parent=0 // pred_fallthru
    _
  // Predicated region
  $region18: #{irnetworks_forward.1} parent=0 // pred_check
    _
  $region19: #{irnetworks_forward.1} parent=0 // pred_check_branch
    %19 = sbr.rel (0) target = $region21
  $region20: #{irnetworks_forward.1} parent=0 // pred_region
    _
  $region21: #{irnetworks_forward.1} parent=0 // pred_fallthru
    _
  %v21 = vld [vmem:[%s0] sm:$0xff]
  %v22 = vld [vmem:[%s0 + $0x8] sm:$0xff]
  %v23 = vpack.c.bf16 %v21, %v21
  %v24 = vpack.c.bf16 %v22, %v22
  %v25 = vld [vmem:[%s1] sm:$0xff]
  %v26 = vld [vmem:[%s1 + $0x8] sm:$0xff]
  %v27 = vld [vmem:[%s1 + $0x10] sm:$0xff]
  %v28 = vld [vmem:[%s1 + $0x18] sm:$0xff]
  %v29 = vld [vmem:[%s1 + $0x20] sm:$0xff]
  %v30 = vld [vmem:[%s1 + $0x28] sm:$0xff]
  %v31 = vld [vmem:[%s1 + $0x30] sm:$0xff]
  %v32 = vld [vmem:[%s1 + $0x38] sm:$0xff]
  %v33 = vld [vmem:[%s1 + $0x40] sm:$0xff]
  %v34 = vld [vmem:[%s1 + $0x48] sm:$0xff]
  %v35 = vld [vmem:[%s1 + $0x50] sm:$0xff]
  %v36 = vld [vmem:[%s1 + $0x58] sm:$0xff]
  %v37 = vld [vmem:[%s1 + $0x60] sm:$0xff]
  %v38 = vld [vmem:[%s1 + $0x68] sm:$0xff]
  %v39 = vld [vmem:[%s1 + $0x70] sm:$0xff]
  %v40 = vld [vmem:[%s1 + $0x78] sm:$0xff]
  %v41 = vld [vmem:[%s1 + $0x80] sm:$0xff]
  %v42 = vld [vmem:[%s1 + $0x88] sm:$0xff]
  %v43 = vld [vmem:[%s1 + $0x90] sm:$0xff]
  %v44 = vld [vmem:[%s1 + $0x98] sm:$0xff]
  %v45 = vld [vmem:[%s1 + $0xa0] sm:$0xff]
  %v46 = vld [vmem:[%s1 + $0xa8] sm:$0xff]
  %v47 = vld [vmem:[%s1 + $0xb0] sm:$0xff]
  %v48 = vld [vmem:[%s1 + $0xb8] sm:$0xff]
  %v49 = vld [vmem:[%s1 + $0xc0] sm:$0xff]
  %v50 = vld [vmem:[%s1 + $0xc8] sm:$0xff]
  %v51 = vld [vmem:[%s1 + $0xd0] sm:$0xff]
  %v52 = vld [vmem:[%s1 + $0xd8] sm:$0xff]
  %v53 = vld [vmem:[%s1 + $0xe0] sm:$0xff]
  %v54 = vld [vmem:[%s1 + $0xe8] sm:$0xff]
  %v55 = vld [vmem:[%s1 + $0xf0] sm:$0xff]
  %v56 = vld [vmem:[%s1 + $0xf8] sm:$0xff]
  %v57 = vld [vmem:[%s1 + $0x100] sm:$0xff]
  %v58 = vld [vmem:[%s1 + $0x108] sm:$0xff]
  %v59 = vld [vmem:[%s1 + $0x110] sm:$0x77]
  %v60 = vld [vmem:[%s1 + $0x118] sm:$0x77]
  %v61 = vld [vmem:[%s2] sm:$0xf]
  %v63 = vlaneseq
  %v64 = vshrl.u32 %v63, 7
  %v65 = vsub.s32 0, %v64
  %v66 = vrot.slane %v61, %v65
  %v67 = vlaneseq
  %v68 = vshrl.u32 %v67, 7
  %v69 = vsub.s32 1, %v68
  %v70 = vrot.slane %v61, %v69
  %v71 = vlaneseq
  %v72 = vshrl.u32 %v71, 7
  %v73 = vsub.s32 2, %v72
  %v74 = vrot.slane %v61, %v73
  %v75 = vlaneseq
  %v76 = vshrl.u32 %v75, 7
  %v77 = vsub.s32 3, %v76
  %v78 = vrot.slane %v61, %v77
  %v119 = vunpack.c.l.b16 %v25
  %v120 = vunpack.c.h.b16 %v25
  %v121 = vunpack.c.l.b16 %v26
  %v122 = vunpack.c.h.b16 %v26
  %v123 = vunpack.c.l.b16 %v27
  %v124 = vunpack.c.h.b16 %v27
  %v125 = vunpack.c.l.b16 %v28
  %v126 = vunpack.c.h.b16 %v28
  %v127 = vunpack.c.l.b16 %v29
  %v128 = vunpack.c.h.b16 %v29
  %v129 = vunpack.c.l.b16 %v30
  %v130 = vunpack.c.h.b16 %v30
  %v131 = vunpack.c.l.b16 %v31
  %v132 = vunpack.c.h.b16 %v31
  %v133 = vunpack.c.l.b16 %v32
  %v134 = vunpack.c.h.b16 %v32
  %v135 = vunpack.c.l.b16 %v33
  %v136 = vunpack.c.h.b16 %v33
  %v137 = vunpack.c.l.b16 %v34
  %v138 = vunpack.c.h.b16 %v34
  %v139 = vunpack.c.l.b16 %v35
  %v140 = vunpack.c.h.b16 %v35
  %v141 = vunpack.c.l.b16 %v36
  %v142 = vunpack.c.h.b16 %v36
  %v143 = vunpack.c.l.b16 %v37
  %v144 = vunpack.c.h.b16 %v37
  %v145 = vunpack.c.l.b16 %v38
  %v146 = vunpack.c.h.b16 %v38
  %v147 = vunpack.c.l.b16 %v39
  %v148 = vunpack.c.h.b16 %v39
  %v149 = vunpack.c.l.b16 %v40
  %v150 = vunpack.c.h.b16 %v40
  %v151 = vunpack.c.l.b16 %v41
  %v152 = vunpack.c.h.b16 %v41
  %v153 = vunpack.c.l.b16 %v42
  %v154 = vunpack.c.h.b16 %v42
  %v155 = vunpack.c.l.b16 %v43
  %v156 = vunpack.c.h.b16 %v43
  %v157 = vunpack.c.l.b16 %v44
  %v158 = vunpack.c.h.b16 %v44
  %v159 = vunpack.c.l.b16 %v45
  %v160 = vunpack.c.h.b16 %v45
  %v161 = vunpack.c.l.b16 %v46
  %v162 = vunpack.c.h.b16 %v46
  %v163 = vunpack.c.l.b16 %v47
  %v164 = vunpack.c.h.b16 %v47
  %v165 = vunpack.c.l.b16 %v48
  %v166 = vunpack.c.h.b16 %v48
  %v167 = vunpack.c.l.b16 %v49
  %v168 = vunpack.c.h.b16 %v49
  %v169 = vunpack.c.l.b16 %v50
  %v170 = vunpack.c.h.b16 %v50
  %v171 = vunpack.c.l.b16 %v51
  %v172 = vunpack.c.h.b16 %v51
  %v173 = vunpack.c.l.b16 %v52
  %v174 = vunpack.c.h.b16 %v52
  %v175 = vunpack.c.l.b16 %v53
  %v176 = vunpack.c.h.b16 %v53
  %v177 = vunpack.c.l.b16 %v54
  %v178 = vunpack.c.h.b16 %v54
  %v179 = vunpack.c.l.b16 %v55
  %v180 = vunpack.c.h.b16 %v55
  %v181 = vunpack.c.l.b16 %v56
  %v182 = vunpack.c.h.b16 %v56
  %v183 = vunpack.c.l.b16 %v57
  %v184 = vunpack.c.h.b16 %v57
  %v185 = vunpack.c.l.b16 %v58
  %v186 = vunpack.c.h.b16 %v58
  %v187 = vunpack.c.l.b16 %v59
  %v188 = vunpack.c.h.b16 %v59
  %v189 = vunpack.c.l.b16 %v60
  %v190 = vunpack.c.h.b16 %v60
  %v191 = vpack.c.b16 %v123, %v119
  %v192 = vpack.c.b16 %v124, %v120
  %v193 = vpack.c.b16 %v125, %v121
  %v194 = vpack.c.b16 %v126, %v122
  %v195 = vpack.c.b16 %v131, %v127
  %v196 = vpack.c.b16 %v132, %v128
  %v197 = vpack.c.b16 %v133, %v129
  %v198 = vpack.c.b16 %v134, %v130
  %v199 = vpack.c.b16 %v139, %v135
  %v200 = vpack.c.b16 %v140, %v136
  %v201 = vpack.c.b16 %v141, %v137
  %v202 = vpack.c.b16 %v142, %v138
  %v203 = vpack.c.b16 %v147, %v143
  %v204 = vpack.c.b16 %v148, %v144
  %v205 = vpack.c.b16 %v149, %v145
  %v206 = vpack.c.b16 %v150, %v146
  %v207 = vpack.c.b16 %v155, %v151
  %v208 = vpack.c.b16 %v156, %v152
  %v209 = vpack.c.b16 %v157, %v153
  %v210 = vpack.c.b16 %v158, %v154
  %v211 = vpack.c.b16 %v163, %v159
  %v212 = vpack.c.b16 %v164, %v160
  %v213 = vpack.c.b16 %v165, %v161
  %v214 = vpack.c.b16 %v166, %v162
  %v215 = vpack.c.b16 %v171, %v167
  %v216 = vpack.c.b16 %v172, %v168
  %v217 = vpack.c.b16 %v173, %v169
  %v218 = vpack.c.b16 %v174, %v170
  %v219 = vpack.c.b16 %v179, %v175
  %v220 = vpack.c.b16 %v180, %v176
  %v221 = vpack.c.b16 %v181, %v177
  %v222 = vpack.c.b16 %v182, %v178
  %v223 = vpack.c.b16 %v187, %v183
  %v224 = vpack.c.b16 %v188, %v184
  %v225 = vpack.c.b16 %v189, %v185
  %v226 = vpack.c.b16 %v190, %v186
  %vm259 = vcmask 113664
  %v261 = vsel %vm259, %v24, 0
  %vm263 = vcmask 1046528
  %v265 = vsel %vm263, %v223, 0
  %v268 = vsel %vm263, %v224, 0
  %v271 = vsel %vm263, %v225, 0
  %v274 = vsel %vm263, %v226, 0
  %276 = vmatprep.subr.bf16.mxu0 %v192
  %277 = vmatpush1.bf16.msra.mxu0 %v191
  %278 = vmatprep.subr.bf16.mxu0 %v196
  %279 = vmatpush1.bf16.msra.mxu0 %v195
  %280 = vmatprep.subr.bf16.mxu0 %v200
  %281 = vmatpush1.bf16.msra.mxu0 %v199
  %282 = vmatprep.subr.bf16.mxu0 %v204
  %283 = vmatpush1.bf16.msra.mxu0 %v203
  %284 = vmatprep.subr.bf16.mxu0 %v208
  %285 = vmatpush1.bf16.msra.mxu0 %v207
  %286 = vmatprep.subr.bf16.mxu0 %v212
  %287 = vmatpush1.bf16.msra.mxu0 %v211
  %288 = vmatprep.subr.bf16.mxu0 %v216
  %289 = vmatpush1.bf16.msra.mxu0 %v215
  %290 = vmatprep.subr.bf16.mxu0 %v220
  %291 = vmatpush1.bf16.msra.mxu0 %v219
  %292 = vmatprep.subr.bf16.mxu0 %v268
  %293 = vmatpush1.bf16.msra.mxu0 %v265
  %294 = vmatprep.subr.bf16.mxu0 0
  %295 = vmatpush1.bf16.msra.mxu0 0
  %296 = vmatprep.subr.bf16.mxu0 0
  %297 = vmatpush1.bf16.msra.mxu0 0
  %298 = vmatprep.subr.bf16.mxu0 0
  %299 = vmatpush1.bf16.msra.mxu0 0
  %300 = vmatprep.subr.bf16.mxu0 0
  %301 = vmatpush1.bf16.msra.mxu0 0
  %302 = vmatprep.subr.bf16.mxu0 0
  %303 = vmatpush1.bf16.msra.mxu0 0
  %304 = vmatprep.subr.bf16.mxu0 0
  %305 = vmatpush1.bf16.msra.mxu0 0
  %306 = vmatprep.subr.bf16.mxu0 0
  %307 = vmatpush1.bf16.msra.mxu0 0
  %308 = vmatprep.mubr.bf16.mxu0 %v261
  %309 = vmatmul.mubr.bf16.gmra.mrb[0].mxu0 %v23
  %v310 = vpop.f32.mrb[0].mxu0
  %v311 = vadd.f32 %v66, %v310
  %v312 = vpop.f32.mrb[0].mxu0
  %v313 = vadd.f32 %v70, %v312
  %v314 = vpop.f32.mrb[0].mxu0
  %v315 = vpop.f32.mrb[0].mxu0
  %316 = vdwg.mxu0
  %317 = vmatprep.subr.bf16.mxu0 %v194
  %318 = vmatpush1.bf16.msra.mxu0 %v193
  %319 = vmatprep.subr.bf16.mxu0 %v198
  %320 = vmatpush1.bf16.msra.mxu0 %v197
  %321 = vmatprep.subr.bf16.mxu0 %v202
  %322 = vmatpush1.bf16.msra.mxu0 %v201
  %323 = vmatprep.subr.bf16.mxu0 %v206
  %324 = vmatpush1.bf16.msra.mxu0 %v205
  %325 = vmatprep.subr.bf16.mxu0 %v210
  %326 = vmatpush1.bf16.msra.mxu0 %v209
  %327 = vmatprep.subr.bf16.mxu0 %v214
  %328 = vmatpush1.bf16.msra.mxu0 %v213
  %329 = vmatprep.subr.bf16.mxu0 %v218
  %330 = vmatpush1.bf16.msra.mxu0 %v217
  %331 = vmatprep.subr.bf16.mxu0 %v222
  %332 = vmatpush1.bf16.msra.mxu0 %v221
  %333 = vmatprep.subr.bf16.mxu0 %v274
  %334 = vmatpush1.bf16.msra.mxu0 %v271
  %335 = vmatprep.subr.bf16.mxu0 0
  %336 = vmatpush1.bf16.msra.mxu0 0
  %337 = vmatprep.subr.bf16.mxu0 0
  %338 = vmatpush1.bf16.msra.mxu0 0
  %339 = vmatprep.subr.bf16.mxu0 0
  %340 = vmatpush1.bf16.msra.mxu0 0
  %341 = vmatprep.subr.bf16.mxu0 0
  %342 = vmatpush1.bf16.msra.mxu0 0
  %343 = vmatprep.subr.bf16.mxu0 0
  %344 = vmatpush1.bf16.msra.mxu0 0
  %345 = vmatprep.subr.bf16.mxu0 0
  %346 = vmatpush1.bf16.msra.mxu0 0
  %347 = vmatprep.subr.bf16.mxu0 0
  %348 = vmatpush1.bf16.msra.mxu0 0
  %349 = vmatprep.mubr.bf16.mxu0 %v261
  %350 = vmatmul.mubr.bf16.gmra.mrb[0].mxu0 %v23
  %v351 = vpop.f32.mrb[0].mxu0
  %v352 = vadd.f32 %v74, %v351
  %v353 = vpop.f32.mrb[0].mxu0
  %v354 = vadd.f32 %v78, %v353
  %v355 = vpop.f32.mrb[0].mxu0
  %v356 = vpop.f32.mrb[0].mxu0
  %357 = vdwg.mxu0
  %v358 = vmax.f32 %v311, 0.0
  %v359 = vmax.f32 %v313, 0.0
  %v360 = vmax.f32 %v352, 0.0
  %v361 = vmax.f32 %v354, 0.0
  %v362 = vpack.c.bf16 %v358, %v358
  %v363 = vpack.c.bf16 %v359, %v359
  %v364 = vpack.c.bf16 %v360, %v360
  %v365 = vpack.c.bf16 %v361, %v361
  %v366 = vld [vmem:[%s3] sm:$0xf]
  %v367 = vld [vmem:[%s3 + $0x4] sm:$0xf]
  %v368 = vld [vmem:[%s3 + $0x8] sm:$0xf]
  %v369 = vld [vmem:[%s3 + $0xc] sm:$0xf]
  %v370 = vld [vmem:[%s3 + $0x10] sm:$0xf]
  %v371 = vld [vmem:[%s3 + $0x14] sm:$0xf]
  %v372 = vld [vmem:[%s3 + $0x18] sm:$0xf]
  %v373 = vld [vmem:[%s3 + $0x1c] sm:$0xf]
  %v374 = vld [vmem:[%s3 + $0x20] sm:$0xf]
  %v375 = vld [vmem:[%s3 + $0x24] sm:$0xf]
  %v376 = vld [vmem:[%s3 + $0x28] sm:$0xf]
  %v377 = vld [vmem:[%s3 + $0x2c] sm:$0xf]
  %v378 = vld [vmem:[%s3 + $0x30] sm:$0xf]
  %v379 = vld [vmem:[%s3 + $0x34] sm:$0xf]
  %v380 = vld [vmem:[%s3 + $0x38] sm:$0xf]
  %v381 = vld [vmem:[%s3 + $0x3c] sm:$0xf]
  %v382 = vld [vmem:[%s3 + $0x40] sm:$0xf]
  %v383 = vld [vmem:[%s3 + $0x44] sm:$0xf]
  %v384 = vld [vmem:[%s3 + $0x48] sm:$0xf]
  %v385 = vld [vmem:[%s3 + $0x4c] sm:$0xf]
  %v386 = vld [vmem:[%s3 + $0x50] sm:$0xf]
  %v387 = vld [vmem:[%s3 + $0x54] sm:$0xf]
  %v388 = vld [vmem:[%s3 + $0x58] sm:$0xf]
  %v389 = vld [vmem:[%s3 + $0x5c] sm:$0xf]
  %v390 = vld [vmem:[%s3 + $0x60] sm:$0xf]
  %v391 = vld [vmem:[%s3 + $0x64] sm:$0xf]
  %v392 = vld [vmem:[%s3 + $0x68] sm:$0xf]
  %v393 = vld [vmem:[%s3 + $0x6c] sm:$0xf]
  %v394 = vld [vmem:[%s3 + $0x70] sm:$0xf]
  %v395 = vld [vmem:[%s3 + $0x74] sm:$0xf]
  %v396 = vld [vmem:[%s3 + $0x78] sm:$0xf]
  %v397 = vld [vmem:[%s3 + $0x7c] sm:$0xf]
  %v398 = vld [vmem:[%s3 + $0x80] sm:$0xf]
  %v399 = vld [vmem:[%s3 + $0x84] sm:$0xf]
  %v400 = vld [vmem:[%s3 + $0x88] sm:$0xf]
  %v401 = vld [vmem:[%s3 + $0x8c] sm:$0xf]
  %v402 = vld [vmem:[%s3 + $0x90] sm:$0xf]
  %v403 = vld [vmem:[%s3 + $0x94] sm:$0xf]
  %v404 = vld [vmem:[%s3 + $0x98] sm:$0xf]
  %v405 = vld [vmem:[%s3 + $0x9c] sm:$0xf]
  %v406 = vld [vmem:[%s3 + $0xa0] sm:$0xf]
  %v407 = vld [vmem:[%s3 + $0xa4] sm:$0xf]
  %v408 = vld [vmem:[%s3 + $0xa8] sm:$0xf]
  %v409 = vld [vmem:[%s3 + $0xac] sm:$0xf]
  %v410 = vld [vmem:[%s3 + $0xb0] sm:$0xf]
  %v411 = vld [vmem:[%s3 + $0xb4] sm:$0xf]
  %v412 = vld [vmem:[%s3 + $0xb8] sm:$0xf]
  %v413 = vld [vmem:[%s3 + $0xbc] sm:$0xf]
  %v414 = vld [vmem:[%s3 + $0xc0] sm:$0xf]
  %v415 = vld [vmem:[%s3 + $0xc4] sm:$0xf]
  %v416 = vld [vmem:[%s3 + $0xc8] sm:$0xf]
  %v417 = vld [vmem:[%s3 + $0xcc] sm:$0xf]
  %v418 = vld [vmem:[%s3 + $0xd0] sm:$0xf]
  %v419 = vld [vmem:[%s3 + $0xd4] sm:$0xf]
  %v420 = vld [vmem:[%s3 + $0xd8] sm:$0xf]
  %v421 = vld [vmem:[%s3 + $0xdc] sm:$0xf]
  %v422 = vld [vmem:[%s3 + $0xe0] sm:$0xf]
  %v423 = vld [vmem:[%s3 + $0xe4] sm:$0xf]
  %v424 = vld [vmem:[%s3 + $0xe8] sm:$0xf]
  %v425 = vld [vmem:[%s3 + $0xec] sm:$0xf]
  %v426 = vld [vmem:[%s3 + $0xf0] sm:$0xf]
  %v427 = vld [vmem:[%s3 + $0xf4] sm:$0xf]
  %v428 = vld [vmem:[%s3 + $0xf8] sm:$0x3]
  %v429 = vld [vmem:[%s4] sm:$0x1]
  %v431 = vlaneseq
  %v432 = vshrl.u32 %v431, 7
  %v433 = vsub.s32 0, %v432
  %v434 = vrot.slane %v429, %v433
  %v499 = vunpack.c.l.b16 %v366
  %v500 = vunpack.c.l.b16 %v367
  %v501 = vunpack.c.l.b16 %v368
  %v502 = vunpack.c.l.b16 %v369
  %v503 = vunpack.c.l.b16 %v370
  %v504 = vunpack.c.l.b16 %v371
  %v505 = vunpack.c.l.b16 %v372
  %v506 = vunpack.c.l.b16 %v373
  %v507 = vunpack.c.l.b16 %v374
  %v508 = vunpack.c.l.b16 %v375
  %v509 = vunpack.c.l.b16 %v376
  %v510 = vunpack.c.l.b16 %v377
  %v511 = vunpack.c.l.b16 %v378
  %v512 = vunpack.c.l.b16 %v379
  %v513 = vunpack.c.l.b16 %v380
  %v514 = vunpack.c.l.b16 %v381
  %v515 = vunpack.c.l.b16 %v382
  %v516 = vunpack.c.l.b16 %v383
  %v517 = vunpack.c.l.b16 %v384
  %v518 = vunpack.c.l.b16 %v385
  %v519 = vunpack.c.l.b16 %v386
  %v520 = vunpack.c.l.b16 %v387
  %v521 = vunpack.c.l.b16 %v388
  %v522 = vunpack.c.l.b16 %v389
  %v523 = vunpack.c.l.b16 %v390
  %v524 = vunpack.c.l.b16 %v391
  %v525 = vunpack.c.l.b16 %v392
  %v526 = vunpack.c.l.b16 %v393
  %v527 = vunpack.c.l.b16 %v394
  %v528 = vunpack.c.l.b16 %v395
  %v529 = vunpack.c.l.b16 %v396
  %v530 = vunpack.c.l.b16 %v397
  %v531 = vunpack.c.l.b16 %v398
  %v532 = vunpack.c.l.b16 %v399
  %v533 = vunpack.c.l.b16 %v400
  %v534 = vunpack.c.l.b16 %v401
  %v535 = vunpack.c.l.b16 %v402
  %v536 = vunpack.c.l.b16 %v403
  %v537 = vunpack.c.l.b16 %v404
  %v538 = vunpack.c.l.b16 %v405
  %v539 = vunpack.c.l.b16 %v406
  %v540 = vunpack.c.l.b16 %v407
  %v541 = vunpack.c.l.b16 %v408
  %v542 = vunpack.c.l.b16 %v409
  %v543 = vunpack.c.l.b16 %v410
  %v544 = vunpack.c.l.b16 %v411
  %v545 = vunpack.c.l.b16 %v412
  %v546 = vunpack.c.l.b16 %v413
  %v547 = vunpack.c.l.b16 %v414
  %v548 = vunpack.c.l.b16 %v415
  %v549 = vunpack.c.l.b16 %v416
  %v550 = vunpack.c.l.b16 %v417
  %v551 = vunpack.c.l.b16 %v418
  %v552 = vunpack.c.l.b16 %v419
  %v553 = vunpack.c.l.b16 %v420
  %v554 = vunpack.c.l.b16 %v421
  %v555 = vunpack.c.l.b16 %v422
  %v556 = vunpack.c.l.b16 %v423
  %v557 = vunpack.c.l.b16 %v424
  %v558 = vunpack.c.l.b16 %v425
  %v559 = vunpack.c.l.b16 %v426
  %v560 = vunpack.c.l.b16 %v427
  %v561 = vunpack.c.l.b16 %v428
  %v562 = vpack.c.b16 %v500, %v499
  %v563 = vpack.c.b16 %v502, %v501
  %v564 = vpack.c.b16 %v504, %v503
  %v565 = vpack.c.b16 %v506, %v505
  %v566 = vpack.c.b16 %v508, %v507
  %v567 = vpack.c.b16 %v510, %v509
  %v568 = vpack.c.b16 %v512, %v511
  %v569 = vpack.c.b16 %v514, %v513
  %v570 = vpack.c.b16 %v516, %v515
  %v571 = vpack.c.b16 %v518, %v517
  %v572 = vpack.c.b16 %v520, %v519
  %v573 = vpack.c.b16 %v522, %v521
  %v574 = vpack.c.b16 %v524, %v523
  %v575 = vpack.c.b16 %v526, %v525
  %v576 = vpack.c.b16 %v528, %v527
  %v577 = vpack.c.b16 %v530, %v529
  %v578 = vpack.c.b16 %v532, %v531
  %v579 = vpack.c.b16 %v534, %v533
  %v580 = vpack.c.b16 %v536, %v535
  %v581 = vpack.c.b16 %v538, %v537
  %v582 = vpack.c.b16 %v540, %v539
  %v583 = vpack.c.b16 %v542, %v541
  %v584 = vpack.c.b16 %v544, %v543
  %v585 = vpack.c.b16 %v546, %v545
  %v586 = vpack.c.b16 %v548, %v547
  %v587 = vpack.c.b16 %v550, %v549
  %v588 = vpack.c.b16 %v552, %v551
  %v589 = vpack.c.b16 %v554, %v553
  %v590 = vpack.c.b16 %v556, %v555
  %v591 = vpack.c.b16 %v558, %v557
  %v592 = vpack.c.b16 %v560, %v559
  %v593 = vpack.c.b16 %v561, %v561
  %vm625 = vcmask 949248
  %v627 = vsel %vm625, %v365, 0
  %vm629 = vcmask 1041408
  %v631 = vsel %vm629, %v593, 0
  %633 = vmatprep.subr.bf16.mxu0 0
  %634 = vmatpush1.bf16.msra.mxu0 %v562
  %635 = vmatprep.subr.bf16.mxu0 0
  %636 = vmatpush1.bf16.msra.mxu0 %v563
  %637 = vmatprep.subr.bf16.mxu0 0
  %638 = vmatpush1.bf16.msra.mxu0 %v564
  %639 = vmatprep.subr.bf16.mxu0 0
  %640 = vmatpush1.bf16.msra.mxu0 %v565
  %641 = vmatprep.subr.bf16.mxu0 0
  %642 = vmatpush1.bf16.msra.mxu0 %v566
  %643 = vmatprep.subr.bf16.mxu0 0
  %644 = vmatpush1.bf16.msra.mxu0 %v567
  %645 = vmatprep.subr.bf16.mxu0 0
  %646 = vmatpush1.bf16.msra.mxu0 %v568
  %647 = vmatprep.subr.bf16.mxu0 0
  %648 = vmatpush1.bf16.msra.mxu0 %v569
  %649 = vmatprep.subr.bf16.mxu0 0
  %650 = vmatpush1.bf16.msra.mxu0 %v570
  %651 = vmatprep.subr.bf16.mxu0 0
  %652 = vmatpush1.bf16.msra.mxu0 %v571
  %653 = vmatprep.subr.bf16.mxu0 0
  %654 = vmatpush1.bf16.msra.mxu0 %v572
  %655 = vmatprep.subr.bf16.mxu0 0
  %656 = vmatpush1.bf16.msra.mxu0 %v573
  %657 = vmatprep.subr.bf16.mxu0 0
  %658 = vmatpush1.bf16.msra.mxu0 %v574
  %659 = vmatprep.subr.bf16.mxu0 0
  %660 = vmatpush1.bf16.msra.mxu0 %v575
  %661 = vmatprep.subr.bf16.mxu0 0
  %662 = vmatpush1.bf16.msra.mxu0 %v576
  %663 = vmatprep.subr.bf16.mxu0 0
  %664 = vmatpush1.bf16.msra.mxu0 %v577
  %665 = vmatprep.mubr.bf16.mxu0 %v363
  %666 = vmatmul.mubr.bf16.gmra.mrb[0].mxu0 %v362
  %v667 = vpop.f32.mrb[0].mxu0
  %v668 = vadd.f32 %v434, %v667
  %v669 = vpop.f32.mrb[0].mxu0
  %v670 = vpop.f32.mrb[0].mxu0
  %v671 = vpop.f32.mrb[0].mxu0
  %672 = vdwg.mxu0
  %673 = vmatprep.subr.bf16.mxu0 0
  %674 = vmatpush1.bf16.msra.mxu0 %v578
  %675 = vmatprep.subr.bf16.mxu0 0
  %676 = vmatpush1.bf16.msra.mxu0 %v579
  %677 = vmatprep.subr.bf16.mxu0 0
  %678 = vmatpush1.bf16.msra.mxu0 %v580
  %679 = vmatprep.subr.bf16.mxu0 0
  %680 = vmatpush1.bf16.msra.mxu0 %v581
  %681 = vmatprep.subr.bf16.mxu0 0
  %682 = vmatpush1.bf16.msra.mxu0 %v582
  %683 = vmatprep.subr.bf16.mxu0 0
  %684 = vmatpush1.bf16.msra.mxu0 %v583
  %685 = vmatprep.subr.bf16.mxu0 0
  %686 = vmatpush1.bf16.msra.mxu0 %v584
  %687 = vmatprep.subr.bf16.mxu0 0
  %688 = vmatpush1.bf16.msra.mxu0 %v585
  %689 = vmatprep.subr.bf16.mxu0 0
  %690 = vmatpush1.bf16.msra.mxu0 %v586
  %691 = vmatprep.subr.bf16.mxu0 0
  %692 = vmatpush1.bf16.msra.mxu0 %v587
  %693 = vmatprep.subr.bf16.mxu0 0
  %694 = vmatpush1.bf16.msra.mxu0 %v588
  %695 = vmatprep.subr.bf16.mxu0 0
  %696 = vmatpush1.bf16.msra.mxu0 %v589
  %697 = vmatprep.subr.bf16.mxu0 0
  %698 = vmatpush1.bf16.msra.mxu0 %v590
  %699 = vmatprep.subr.bf16.mxu0 0
  %700 = vmatpush1.bf16.msra.mxu0 %v591
  %701 = vmatprep.subr.bf16.mxu0 0
  %702 = vmatpush1.bf16.msra.mxu0 %v592
  %703 = vmatprep.subr.bf16.mxu0 0
  %704 = vmatpush1.bf16.msra.mxu0 %v631
  %705 = vmatprep.mubr.bf16.mxu0 %v627
  %706 = vmatmul.mubr.bf16.gmra.mrb[0].mxu0 %v364
  %v707 = vpop.f32.mrb[0].mxu0
  %v708 = vadd.f32 %v668, %v707
  %v709 = vpop.f32.mrb[0].mxu0
  %v710 = vpop.f32.mrb[0].mxu0
  %v711 = vpop.f32.mrb[0].mxu0
  %712 = vdwg.mxu0
  %v713 = vlaneseq
  %v714 = vand.u32 %v713, 127
  %vm715 = vcmp.lt.s32.totalorder %v714, 5
  %v716 = vsel %vm715, %v708, -inf
  %vm717 = vcmask 80896
  %v718 = vsel %vm717, %v716, -inf
  %719 = vmax.xlane.f32.xlu0 %v718
  %v720 = vpop.xlane.xlu0 %719
  %v721 = vsel %vm715, -inf, %v708
  %v722 = vsel %vm717, %v721, -inf
  %723 = vmax.xlane.f32.xlu0 %v722
  %v724 = vpop.xlane.xlu0 %723
  %v725 = vsel %vm715, %v720, %v724
  %v726 = vsub.f32 %v708, %v725
  %v727 = vmul.f32 %v726, 1.442695
  %v728 = vpow.pop %v727
  %v729 = vsel %vm715, %v728, 0.0
  %v730 = vsel %vm717, %v729, 0.0
  %731 = vadd.xlane.f32.xlu0 %v730
  %v732 = vpop.xlane.xlu0 %731
  %v733 = vsel %vm715, 0.0, %v728
  %v734 = vsel %vm717, %v733, 0.0
  %735 = vadd.xlane.f32.xlu0 %v734
  %v736 = vpop.xlane.xlu0 %735
  %v737 = vrcp.pop %v732
  %v738 = vrcp.pop %v736
  %v739 = vsel %vm715, %v737, %v738
  %v740 = vmul.f32 %v728, %v739
  %741 = vst.msk [vmem:[%s5] sm:$0xff] %vm717, %v740
  // Predicated region
  $region22: #{irnetworks_forward.1} parent=0 // pred_check
    _
  $region23: #{irnetworks_forward.1} parent=0 // pred_check_branch
    %743 = sbr.rel (0) target = $region25
  $region24: #{irnetworks_forward.1} parent=0 // pred_region
    _
  $region25: #{irnetworks_forward.1} parent=0 // pred_fallthru
    _
  // Predicated region
  $region26: #{irnetworks_forward.1} parent=0 // pred_check
    _
  $region27: #{irnetworks_forward.1} parent=0 // pred_check_branch
    %745 = sbr.rel (0) target = $region29
  $region28: #{irnetworks_forward.1} parent=0 // pred_region
    _
  $region29: #{irnetworks_forward.1} parent=0 // pred_fallthru
    _

</llo_original>
